<compile_context>
chip_gen: v7x
topology: tpu7x:2x2x1
jax: 0.10.0
libtpu: 0.0.40
codegen_flags: <defaults>
</compile_context>

<pallas_src>
import jax
import jax.numpy as jnp
from jax.experimental import pallas as pl
from jax.experimental.pallas import tpu as pltpu


def residual_block_kernel(x_ref, w1_ref, b1_ref, w2_ref, b2_ref, out_ref):
    """Fused residual block for one image.

    x_ref  : (1, H, W*Cin)        lane-dense input slab (NHWC flattened on W,C)
    w*_ref : (3, W*Cin, W*Cout)   width-banded conv weights, indexed by dy
    b*_ref : (1, W*Cout)          bias tiled along W
    out_ref: (1, H, W*Cout)
    """
    H = x_ref.shape[1]
    x = x_ref[0]                                   # (H, W*Cin)

    # ---- conv1: height halo = two zero rows, width halo encoded in bands ----
    zrow = jnp.zeros((1, x.shape[1]), x.dtype)
    xp = jnp.concatenate([zrow, x, zrow], axis=0)  # (H+2, W*Cin), registers only

    acc = jnp.dot(xp[0:H], w1_ref[0], preferred_element_type=jnp.float32)
    acc += jnp.dot(xp[1:H + 1], w1_ref[1], preferred_element_type=jnp.float32)
    acc += jnp.dot(xp[2:H + 2], w1_ref[2], preferred_element_type=jnp.float32)
    h1 = jnp.maximum(acc + b1_ref[...], 0.0)       # (H, W*Cout), ReLU

    # ---- conv2 ----
    zrow2 = jnp.zeros((1, h1.shape[1]), h1.dtype)
    hp = jnp.concatenate([zrow2, h1, zrow2], axis=0)

    acc2 = jnp.dot(hp[0:H], w2_ref[0], preferred_element_type=jnp.float32)
    acc2 += jnp.dot(hp[1:H + 1], w2_ref[1], preferred_element_type=jnp.float32)
    acc2 += jnp.dot(hp[2:H + 2], w2_ref[2], preferred_element_type=jnp.float32)

    # ---- bias + residual (reuse the input slab already in registers) ----
    out_ref[0] = acc2 + b2_ref[...] + x


def band_conv_weights(w, W):
    """(3, 3, Cin, Cout) HWIO -> (3, W*Cin, W*Cout) banded over the width dim.

    Band dy maps input row y+dy-1 to output row y; the width stencil (dx) and
    its zero padding are baked into the block-banded structure:
      Wband[dy][x_in*Cin + ci, x_out*Cout + co] = w[dy, dx, ci, co]
      iff x_in == x_out + dx - 1.
    """
    eye = jnp.stack([jnp.eye(W, k=1 - dx, dtype=w.dtype) for dx in range(3)])
    # eye[d, xin, xout] = 1 iff xin == xout + d - 1
    wb = jnp.einsum('dio,ydcz->yicoz', eye, w)     # (3, W, Cin, W, Cout)
    Cin, Cout = w.shape[2], w.shape[3]
    return wb.reshape(3, W * Cin, W * Cout)


def residual_block(x_nchw, w1, b1, w2, b2):
    """Wrapper: NCHW in / NCHW out, matching the PyTorch module."""
    N, C, H, W = x_nchw.shape
    Cout = w1.shape[-1]

    # NCHW -> lane-dense (N, H, W*C) slab (no jnp.pad of the activation).
    x = jnp.transpose(x_nchw, (0, 2, 3, 1)).reshape(N, H, W * C)
    w1b = band_conv_weights(w1, W)
    w2b = band_conv_weights(w2, W)
    b1r = jnp.tile(b1, W)[None, :]                 # (1, W*Cout)
    b2r = jnp.tile(b2, W)[None, :]

    out = pl.pallas_call(
        residual_block_kernel,
        out_shape=jax.ShapeDtypeStruct((N, H, W * Cout), jnp.float32),
        grid_spec=pltpu.PrefetchScalarGridSpec(
            num_scalar_prefetch=0,
            grid=(N,),
            in_specs=[
                pl.BlockSpec((1, H, W * C), lambda n: (n, 0, 0)),
                pl.BlockSpec((3, W * C, W * Cout), lambda n: (0, 0, 0)),
                pl.BlockSpec((1, W * Cout), lambda n: (0, 0)),
                pl.BlockSpec((3, W * Cout, W * Cout), lambda n: (0, 0, 0)),
                pl.BlockSpec((1, W * Cout), lambda n: (0, 0)),
            ],
            out_specs=pl.BlockSpec((1, H, W * Cout), lambda n: (n, 0, 0)),
        ),
        compiler_params=pltpu.CompilerParams(
            dimension_semantics=("parallel",)),
    )(x, w1b, b1r, w2b, b2r)

    out = out.reshape(N, H, W, Cout)
    return jnp.transpose(out, (0, 3, 1, 2))        # -> NCHW


def ref_forward(x_nchw, w1, b1, w2, b2):
    """Pure-JAX reference (lax conv) for correctness check."""
    x = jnp.transpose(x_nchw, (0, 2, 3, 1))
    dn = jax.lax.conv_dimension_numbers(x.shape, w1.shape,
                                        ('NHWC', 'HWIO', 'NHWC'))
    h = jax.lax.conv_general_dilated(x, w1, (1, 1), 'SAME',
                                     dimension_numbers=dn) + b1
    h = jnp.maximum(h, 0.0)
    o = jax.lax.conv_general_dilated(h, w2, (1, 1), 'SAME',
                                     dimension_numbers=dn) + b2
    o = o + x
    return jnp.transpose(o, (0, 3, 1, 2))


if __name__ == "__main__":
    # Residual add requires in_planes == out_planes; W*C = 128 -> lane-dense.
    N, C, H, W = 2, 8, 16, 16

    key = jax.random.PRNGKey(0)
    k_x, k_w1, k_b1, k_w2, k_b2 = jax.random.split(key, 5)

    x = jax.random.normal(k_x, (N, C, H, W), jnp.float32)
    # Deterministic synthetic parameters (HWIO layout for the kernel).
    w1 = jax.random.normal(k_w1, (3, 3, C, C), jnp.float32) * 0.1
    b1 = jax.random.normal(k_b1, (C,), jnp.float32) * 0.1
    w2 = jax.random.normal(k_w2, (3, 3, C, C), jnp.float32) * 0.1
    b2 = jax.random.normal(k_b2, (C,), jnp.float32) * 0.1

    out = jax.block_until_ready(residual_block(x, w1, b1, w2, b2))

    ref = ref_forward(x, w1, b1, w2, b2)
    assert out.shape == (N, C, H, W)
    assert jnp.allclose(out, ref, atol=1e-4, rtol=1e-4), "mismatch vs reference"

    print("KERNEL_OK")
</pallas_src>

<mosaic_0001>
module attributes {stable_mosaic.version = 11 : i64} {
  func.func @residual_block_kernel(%arg0: i32, %arg1: memref<1x16x128xf32, #tpu.memory_space<vmem>>, %arg2: memref<3x128x128xf32, #tpu.memory_space<vmem>>, %arg3: memref<1x128xf32, #tpu.memory_space<vmem>>, %arg4: memref<3x128x128xf32, #tpu.memory_space<vmem>>, %arg5: memref<1x128xf32, #tpu.memory_space<vmem>>, %arg6: memref<1x16x128xf32, #tpu.memory_space<vmem>>) attributes {dimension_semantics = [#tpu.dimension_semantics<parallel>], iteration_bounds = array<i64: 2>, scalar_prefetch = 0 : i64, scratch_operands = 0 : i64, tpu.core_type = #tpu.core_type<tc>, window_params = [{transform_indices = @transform_0, window_bounds = array<i64: 1, 16, 128>}, {pipeline_mode = #tpu.pipeline_mode<synchronous>, transform_indices = @transform_1, window_bounds = array<i64: 3, 128, 128>}, {pipeline_mode = #tpu.pipeline_mode<synchronous>, transform_indices = @transform_2, window_bounds = array<i64: 1, 128>}, {pipeline_mode = #tpu.pipeline_mode<synchronous>, transform_indices = @transform_3, window_bounds = array<i64: 3, 128, 128>}, {pipeline_mode = #tpu.pipeline_mode<synchronous>, transform_indices = @transform_4, window_bounds = array<i64: 1, 128>}, {transform_indices = @transform_5, window_bounds = array<i64: 1, 16, 128>}]} {
    %c0 = arith.constant 0 : index
    %c0_0 = arith.constant 0 : index
    %c0_1 = arith.constant 0 : index
    %0 = vector.load %arg1[%c0, %c0_0, %c0_1] : memref<1x16x128xf32, #tpu.memory_space<vmem>>, vector<1x16x128xf32>
    %1 = vector.shape_cast %0 : vector<1x16x128xf32> to vector<16x128xf32>
    %cst = arith.constant 0.000000e+00 : f32
    %2 = vector.broadcast %cst : f32 to vector<1x128xf32>
    %3 = tpu.concatenate %2, %1, %2 in 0 : vector<1x128xf32>, vector<16x128xf32>, vector<1x128xf32> -> vector<18x128xf32>
    %4 = vector.extract_strided_slice %3 {offsets = [0, 0], sizes = [16, 128], strides = [1, 1]} : vector<18x128xf32> to vector<16x128xf32>
    %c0_2 = arith.constant 0 : index
    %c0_3 = arith.constant 0 : index
    %c0_4 = arith.constant 0 : index
    %5 = vector.load %arg2[%c0_2, %c0_3, %c0_4] : memref<3x128x128xf32, #tpu.memory_space<vmem>>, vector<1x128x128xf32>
    %6 = vector.shape_cast %5 : vector<1x128x128xf32> to vector<128x128xf32>
    %cst_5 = arith.constant dense<0.000000e+00> : vector<16x128xf32>
    %7 = tpu.matmul %4, %6, %cst_5 {dimension_numbers = #tpu.dot_dimension_numbers<[1], [0], [0], [1], [0, 0, 1, 1], [], []>} : vector<16x128xf32>, vector<128x128xf32>, vector<16x128xf32> -> vector<16x128xf32>
    %8 = vector.extract_strided_slice %3 {offsets = [1, 0], sizes = [16, 128], strides = [1, 1]} : vector<18x128xf32> to vector<16x128xf32>
    %c1 = arith.constant 1 : index
    %c0_6 = arith.constant 0 : index
    %c0_7 = arith.constant 0 : index
    %9 = vector.load %arg2[%c1, %c0_6, %c0_7] : memref<3x128x128xf32, #tpu.memory_space<vmem>>, vector<1x128x128xf32>
    %10 = vector.shape_cast %9 : vector<1x128x128xf32> to vector<128x128xf32>
    %cst_8 = arith.constant dense<0.000000e+00> : vector<16x128xf32>
    %11 = tpu.matmul %8, %10, %cst_8 {dimension_numbers = #tpu.dot_dimension_numbers<[1], [0], [0], [1], [0, 0, 1, 1], [], []>} : vector<16x128xf32>, vector<128x128xf32>, vector<16x128xf32> -> vector<16x128xf32>
    %12 = arith.addf %7, %11 : vector<16x128xf32>
    %13 = vector.extract_strided_slice %3 {offsets = [2, 0], sizes = [16, 128], strides = [1, 1]} : vector<18x128xf32> to vector<16x128xf32>
    %c2 = arith.constant 2 : index
    %c0_9 = arith.constant 0 : index
    %c0_10 = arith.constant 0 : index
    %14 = vector.load %arg2[%c2, %c0_9, %c0_10] : memref<3x128x128xf32, #tpu.memory_space<vmem>>, vector<1x128x128xf32>
    %15 = vector.shape_cast %14 : vector<1x128x128xf32> to vector<128x128xf32>
    %cst_11 = arith.constant dense<0.000000e+00> : vector<16x128xf32>
    %16 = tpu.matmul %13, %15, %cst_11 {dimension_numbers = #tpu.dot_dimension_numbers<[1], [0], [0], [1], [0, 0, 1, 1], [], []>} : vector<16x128xf32>, vector<128x128xf32>, vector<16x128xf32> -> vector<16x128xf32>
    %17 = arith.addf %12, %16 : vector<16x128xf32>
    %c0_12 = arith.constant 0 : index
    %c0_13 = arith.constant 0 : index
    %18 = vector.load %arg3[%c0_12, %c0_13] : memref<1x128xf32, #tpu.memory_space<vmem>>, vector<1x128xf32>
    %19 = vector.broadcast %18 : vector<1x128xf32> to vector<16x128xf32>
    %20 = arith.addf %17, %19 : vector<16x128xf32>
    %cst_14 = arith.constant 0.000000e+00 : f32
    %21 = vector.broadcast %cst_14 : f32 to vector<16x128xf32>
    %22 = arith.maximumf %20, %21 : vector<16x128xf32>
    %cst_15 = arith.constant 0.000000e+00 : f32
    %23 = vector.broadcast %cst_15 : f32 to vector<1x128xf32>
    %24 = tpu.concatenate %23, %22, %23 in 0 : vector<1x128xf32>, vector<16x128xf32>, vector<1x128xf32> -> vector<18x128xf32>
    %25 = vector.extract_strided_slice %24 {offsets = [0, 0], sizes = [16, 128], strides = [1, 1]} : vector<18x128xf32> to vector<16x128xf32>
    %c0_16 = arith.constant 0 : index
    %c0_17 = arith.constant 0 : index
    %c0_18 = arith.constant 0 : index
    %26 = vector.load %arg4[%c0_16, %c0_17, %c0_18] : memref<3x128x128xf32, #tpu.memory_space<vmem>>, vector<1x128x128xf32>
    %27 = vector.shape_cast %26 : vector<1x128x128xf32> to vector<128x128xf32>
    %cst_19 = arith.constant dense<0.000000e+00> : vector<16x128xf32>
    %28 = tpu.matmul %25, %27, %cst_19 {dimension_numbers = #tpu.dot_dimension_numbers<[1], [0], [0], [1], [0, 0, 1, 1], [], []>} : vector<16x128xf32>, vector<128x128xf32>, vector<16x128xf32> -> vector<16x128xf32>
    %29 = vector.extract_strided_slice %24 {offsets = [1, 0], sizes = [16, 128], strides = [1, 1]} : vector<18x128xf32> to vector<16x128xf32>
    %c1_20 = arith.constant 1 : index
    %c0_21 = arith.constant 0 : index
    %c0_22 = arith.constant 0 : index
    %30 = vector.load %arg4[%c1_20, %c0_21, %c0_22] : memref<3x128x128xf32, #tpu.memory_space<vmem>>, vector<1x128x128xf32>
    %31 = vector.shape_cast %30 : vector<1x128x128xf32> to vector<128x128xf32>
    %cst_23 = arith.constant dense<0.000000e+00> : vector<16x128xf32>
    %32 = tpu.matmul %29, %31, %cst_23 {dimension_numbers = #tpu.dot_dimension_numbers<[1], [0], [0], [1], [0, 0, 1, 1], [], []>} : vector<16x128xf32>, vector<128x128xf32>, vector<16x128xf32> -> vector<16x128xf32>
    %33 = arith.addf %28, %32 : vector<16x128xf32>
    %34 = vector.extract_strided_slice %24 {offsets = [2, 0], sizes = [16, 128], strides = [1, 1]} : vector<18x128xf32> to vector<16x128xf32>
    %c2_24 = arith.constant 2 : index
    %c0_25 = arith.constant 0 : index
    %c0_26 = arith.constant 0 : index
    %35 = vector.load %arg4[%c2_24, %c0_25, %c0_26] : memref<3x128x128xf32, #tpu.memory_space<vmem>>, vector<1x128x128xf32>
    %36 = vector.shape_cast %35 : vector<1x128x128xf32> to vector<128x128xf32>
    %cst_27 = arith.constant dense<0.000000e+00> : vector<16x128xf32>
    %37 = tpu.matmul %34, %36, %cst_27 {dimension_numbers = #tpu.dot_dimension_numbers<[1], [0], [0], [1], [0, 0, 1, 1], [], []>} : vector<16x128xf32>, vector<128x128xf32>, vector<16x128xf32> -> vector<16x128xf32>
    %38 = arith.addf %33, %37 : vector<16x128xf32>
    %c0_28 = arith.constant 0 : index
    %c0_29 = arith.constant 0 : index
    %39 = vector.load %arg5[%c0_28, %c0_29] : memref<1x128xf32, #tpu.memory_space<vmem>>, vector<1x128xf32>
    %40 = vector.broadcast %39 : vector<1x128xf32> to vector<16x128xf32>
    %41 = arith.addf %38, %40 : vector<16x128xf32>
    %42 = arith.addf %41, %1 : vector<16x128xf32>
    %c0_30 = arith.constant 0 : index
    %c0_31 = arith.constant 0 : index
    %c0_32 = arith.constant 0 : index
    %43 = vector.load %arg6[%c0_30, %c0_31, %c0_32] : memref<1x16x128xf32, #tpu.memory_space<vmem>>, vector<1x16x128xf32>
    %44 = vector.shape_cast %43 : vector<1x16x128xf32> to vector<16x128xf32>
    %45 = vector.shape_cast %42 : vector<16x128xf32> to vector<1x16x128xf32>
    tpu.vector_store %arg6[%c0_30, %c0_31, %c0_32], %45 {strides = array<i32>} : memref<1x16x128xf32, #tpu.memory_space<vmem>>, vector<1x16x128xf32>,
    return
  }
  func.func @transform_0(%arg0: i32) -> (i32, i32, i32) {
    %c0_i32 = arith.constant 0 : i32
    %c0_i32_0 = arith.constant 0 : i32
    %c0_i32_1 = arith.constant 0 : i32
    return %arg0, %c0_i32, %c0_i32_0 : i32, i32, i32
  }
  func.func @transform_1(%arg0: i32) -> (i32, i32, i32) {
    %c0_i32 = arith.constant 0 : i32
    %c0_i32_0 = arith.constant 0 : i32
    %c0_i32_1 = arith.constant 0 : i32
    %c0_i32_2 = arith.constant 0 : i32
    return %c0_i32, %c0_i32_0, %c0_i32_1 : i32, i32, i32
  }
  func.func @transform_2(%arg0: i32) -> (i32, i32) {
    %c0_i32 = arith.constant 0 : i32
    %c0_i32_0 = arith.constant 0 : i32
    %c0_i32_1 = arith.constant 0 : i32
    return %c0_i32, %c0_i32_0 : i32, i32
  }
  func.func @transform_3(%arg0: i32) -> (i32, i32, i32) {
    %c0_i32 = arith.constant 0 : i32
    %c0_i32_0 = arith.constant 0 : i32
    %c0_i32_1 = arith.constant 0 : i32
    %c0_i32_2 = arith.constant 0 : i32
    return %c0_i32, %c0_i32_0, %c0_i32_1 : i32, i32, i32
  }
  func.func @transform_4(%arg0: i32) -> (i32, i32) {
    %c0_i32 = arith.constant 0 : i32
    %c0_i32_0 = arith.constant 0 : i32
    %c0_i32_1 = arith.constant 0 : i32
    return %c0_i32, %c0_i32_0 : i32, i32
  }
  func.func @transform_5(%arg0: i32) -> (i32, i32, i32) {
    %c0_i32 = arith.constant 0 : i32
    %c0_i32_0 = arith.constant 0 : i32
    %c0_i32_1 = arith.constant 0 : i32
    return %arg0, %c0_i32, %c0_i32_0 : i32, i32, i32
  }
}

</mosaic_0001>

<llo_original>
// kernel: tpu_custom_call.1
$region0: #{tpu_custom_call.1}
  #allocation0 [shape = 'u32[]', space=smem, size = 0x4, offset = 0x4, fixed_abs, tag = 'smem constant byte address 0x4 - core index']
  #allocation1 [shape = 'u32[144,128]{1,0:T(1,128)}', space=vmem, size = 0x12000, scoped, tag = 'internal scratch']
  %s0 = inlined_call_operand.hbm [shape: f32[2,16,128], index: 0, kind: input, shape index: {}]
  %s1 = inlined_call_operand.hbm [shape: f32[3,128,128], index: 1, kind: input, shape index: {}]
  %s2 = inlined_call_operand.vmem [shape: f32[1,128], index: 2, kind: input, shape index: {}]
  %s3 = inlined_call_operand.hbm [shape: f32[3,128,128], index: 3, kind: input, shape index: {}]
  %s4 = inlined_call_operand.vmem [shape: f32[1,128], index: 4, kind: input, shape index: {}]
  %s5 = inlined_call_operand.hbm [shape: f32[2,16,128], index: 5, kind: output, shape index: {}]
  %s6 = sld [smem:[#allocation0]]
  $region65: #{tpu_custom_call.1} parent=0
    _
  %s8 = ssub.s32 1, %s6
  %s9 = scalar_select 0, %s8, %s6
  $region1: #{tpu_custom_call.1} parent=0
    #allocation2 [shape = 'u8[16384]{0}', space=vmem, size = 0x4000, scoped, tag = 'input window, operand 0']
    #allocation3 [shape = 's32[2]{0}', space=sflag, size = 0x8, scoped, tag = 'scoped memory for tpu_custom_call.1']
    #allocation4 [shape = 's32[2]{0}', space=sflag, size = 0x8, scoped, tag = 'scoped memory for tpu_custom_call.1']
    #allocation5 [shape = 'u8[196608]{0}', space=vmem, size = 0x30000, scoped, tag = 'input window, operand 1, single buffered']
    #allocation6 [shape = 's32[1]{0}', space=sflag, size = 0x4, scoped, tag = 'scoped memory for tpu_custom_call.1']
    #allocation7 [shape = 'u8[196608]{0}', space=vmem, size = 0x30000, scoped, tag = 'input window, operand 3, single buffered']
    #allocation8 [shape = 'u8[16384]{0}', space=vmem, size = 0x4000, scoped, tag = 'output window, operand 0']
    %10 = vsyncpa [#allocation3], 0
    %s11 = scalar_lea.sflag [#allocation3], 1
    %12 = vsyncpa %s11, 0
    %13 = vsyncpa [#allocation6], 0
    %14 = vsyncpa [#allocation4], 0
    %s15 = scalar_lea.sflag [#allocation4], 1
    %16 = vsyncpa %s15, 0
    loop: start=0, step=1, limit=4
    $region2: #{tpu_custom_call.1} parent=1 // loop_pre_header
      _
    $region3: #{tpu_custom_call.1} parent=1 // loop_header
      %s18 = sphi 0, %s22
      %p19 = scmp.ge.s32.totalorder %s18, 4
      %s28 = sphi 0, %s30
      %s31 = sphi 0, %s28
      %s32 = sphi 0, %s31
      %s48 = sphi 0, %s32
      %s52 = sphi 0, %s52
      %s54 = sphi 0, %s52
      %s55 = sphi 0, %s54
      %s69 = sphi 0, %s55
      %s73 = sphi 0, %s73
      %s75 = sphi 0, %s73
      %s76 = sphi 0, %s75
      %s90 = sphi 0, %s76
      %s94 = sphi 0, %s94
      %s96 = sphi 0, %s94
      %s97 = sphi 0, %s96
      %s111 = sphi 0, %s97
      %s115 = sphi 0, %s115
      %s117 = sphi 0, %s115
      %s118 = sphi 0, %s117
      %s132 = sphi 0, %s118
      %s138 = sphi 0, %s140
      %s141 = sphi 0, %s138
      %s142 = sphi 0, %s141
      %s158 = sphi 0, %s142
    $region4: #{tpu_custom_call.1} parent=1 // loop_header_branch
      %21 = sbr.rel (%p19) target = $region8
    $region5: #{tpu_custom_call.1} parent=1 // loop_body
      %s23 = ssub.s32 %s18, 1
      %s24 = ssub.s32 %s18, 2
      %s25 = sadd.s32 %s18, 1
      %s26 = ssub.s32 %s18, %s25
      %p27 = scmp.eq.s32.totalorder %s26, 0
      %s29 = sadd.s32 %s28, 1
      %s30 = scalar_select %p27, %s28, %s29
      %p33 = pneg %p27
      %p34 = scmp.eq.s32.totalorder %s18, 1
      %p35 = por %p33, %p34
      %p36 = scmp.ne.s32.totalorder %s28, %s31
      %p37 = scmp.eq.s32.totalorder %s18, 0
      %p38 = por %p36, %p37
      %p39 = scmp.ne.s32.totalorder %s28, %s31
      %p40 = scmp.eq.s32.totalorder %s23, 1
      %p41 = por %p39, %p40
      %p42 = scmp.ne.s32.totalorder %s31, %s32
      %p43 = scmp.eq.s32.totalorder %s23, 0
      %p44 = por %p42, %p43
      %p45 = scmp.ne.s32.totalorder %s31, %s32
      %p46 = scmp.eq.s32.totalorder %s24, 1
      %p47 = por %p45, %p46
      %p49 = scmp.ne.s32.totalorder %s32, %s48
      %p50 = scmp.eq.s32.totalorder %s24, 0
      %p51 = por %p49, %p50
      %s53 = sadd.s32 %s52, 1
      %p56 = scmp.eq.s32.totalorder %s18, 1
      %p57 = scmp.ne.s32.totalorder %s52, %s54
      %p58 = scmp.eq.s32.totalorder %s18, 0
      %p59 = por %p57, %p58
      %p60 = scmp.ne.s32.totalorder %s52, %s54
      %p61 = scmp.eq.s32.totalorder %s23, 1
      %p62 = por %p60, %p61
      %p63 = scmp.ne.s32.totalorder %s54, %s55
      %p64 = scmp.eq.s32.totalorder %s23, 0
      %p65 = por %p63, %p64
      %p66 = scmp.ne.s32.totalorder %s54, %s55
      %p67 = scmp.eq.s32.totalorder %s24, 1
      %p68 = por %p66, %p67
      %p70 = scmp.ne.s32.totalorder %s55, %s69
      %p71 = scmp.eq.s32.totalorder %s24, 0
      %p72 = por %p70, %p71
      %s74 = sadd.s32 %s73, 1
      %p77 = scmp.eq.s32.totalorder %s18, 1
      %p78 = scmp.ne.s32.totalorder %s73, %s75
      %p79 = scmp.eq.s32.totalorder %s18, 0
      %p80 = por %p78, %p79
      %p81 = scmp.ne.s32.totalorder %s73, %s75
      %p82 = scmp.eq.s32.totalorder %s23, 1
      %p83 = por %p81, %p82
      %p84 = scmp.ne.s32.totalorder %s75, %s76
      %p85 = scmp.eq.s32.totalorder %s23, 0
      %p86 = por %p84, %p85
      %p87 = scmp.ne.s32.totalorder %s75, %s76
      %p88 = scmp.eq.s32.totalorder %s24, 1
      %p89 = por %p87, %p88
      %p91 = scmp.ne.s32.totalorder %s76, %s90
      %p92 = scmp.eq.s32.totalorder %s24, 0
      %p93 = por %p91, %p92
      %s95 = sadd.s32 %s94, 1
      %p98 = scmp.eq.s32.totalorder %s18, 1
      %p99 = scmp.ne.s32.totalorder %s94, %s96
      %p100 = scmp.eq.s32.totalorder %s18, 0
      %p101 = por %p99, %p100
      %p102 = scmp.ne.s32.totalorder %s94, %s96
      %p103 = scmp.eq.s32.totalorder %s23, 1
      %p104 = por %p102, %p103
      %p105 = scmp.ne.s32.totalorder %s96, %s97
      %p106 = scmp.eq.s32.totalorder %s23, 0
      %p107 = por %p105, %p106
      %p108 = scmp.ne.s32.totalorder %s96, %s97
      %p109 = scmp.eq.s32.totalorder %s24, 1
      %p110 = por %p108, %p109
      %p112 = scmp.ne.s32.totalorder %s97, %s111
      %p113 = scmp.eq.s32.totalorder %s24, 0
      %p114 = por %p112, %p113
      %s116 = sadd.s32 %s115, 1
      %p119 = scmp.eq.s32.totalorder %s18, 1
      %p120 = scmp.ne.s32.totalorder %s115, %s117
      %p121 = scmp.eq.s32.totalorder %s18, 0
      %p122 = por %p120, %p121
      %p123 = scmp.ne.s32.totalorder %s115, %s117
      %p124 = scmp.eq.s32.totalorder %s23, 1
      %p125 = por %p123, %p124
      %p126 = scmp.ne.s32.totalorder %s117, %s118
      %p127 = scmp.eq.s32.totalorder %s23, 0
      %p128 = por %p126, %p127
      %p129 = scmp.ne.s32.totalorder %s117, %s118
      %p130 = scmp.eq.s32.totalorder %s24, 1
      %p131 = por %p129, %p130
      %p133 = scmp.ne.s32.totalorder %s118, %s132
      %p134 = scmp.eq.s32.totalorder %s24, 0
      %p135 = por %p133, %p134
      %s136 = ssub.s32 %s18, %s25
      %p137 = scmp.eq.s32.totalorder %s136, 0
      %s139 = sadd.s32 %s138, 1
      %s140 = scalar_select %p137, %s138, %s139
      %p143 = pneg %p137
      %p144 = scmp.eq.s32.totalorder %s18, 1
      %p145 = por %p143, %p144
      %p146 = scmp.ne.s32.totalorder %s138, %s141
      %p147 = scmp.eq.s32.totalorder %s18, 0
      %p148 = por %p146, %p147
      %p149 = scmp.ne.s32.totalorder %s138, %s141
      %p150 = scmp.eq.s32.totalorder %s23, 1
      %p151 = por %p149, %p150
      %p152 = scmp.ne.s32.totalorder %s141, %s142
      %p153 = scmp.eq.s32.totalorder %s23, 0
      %p154 = por %p152, %p153
      %p155 = scmp.ne.s32.totalorder %s141, %s142
      %p156 = scmp.eq.s32.totalorder %s24, 1
      %p157 = por %p155, %p156
      %p159 = scmp.ne.s32.totalorder %s142, %s158
      %p160 = scmp.eq.s32.totalorder %s24, 0
      %p161 = por %p159, %p160
      %p162 = scmp.le.s32.totalorder 1, %s18
      %p163 = scmp.lt.s32.totalorder %s18, 3
      %p164 = pnand %p162, %p163
      %p165 = pneg %p164
      // Predicated region
      $region9: #{tpu_custom_call.1} parent=5 // pred_check
        _
      $region10: #{tpu_custom_call.1} parent=5 // pred_check_branch
        %167 = sbr.rel (%p164) target = $region12
      $region11: #{tpu_custom_call.1} parent=5 // pred_region
        %s168 = ssub.s32 %s18, 1
        // Predicated region
        $region13: #{tpu_custom_call.1} parent=11 // pred_check
          %p169 = pneg %p65
        $region14: #{tpu_custom_call.1} parent=11 // pred_check_branch
          %171 = sbr.rel (%p169) target = $region16
        $region15: #{tpu_custom_call.1} parent=11 // pred_region
          %s173 = ssub.s32 6144, 6144
          %174 = vsyncadd [#allocation6], %s173
          %s175 = sshll.u32 [#allocation5], 4
          %s176 = int_to_ptr.vmem [resolvable:$true] %s175
          %181 = dma.hbm_to_vmem [thread:$0]  %s1, 6144, %s176, [#allocation6], 128, 128, 8
        $region16: #{tpu_custom_call.1} parent=11 // pred_fallthru
          _
        // Predicated region
        $region17: #{tpu_custom_call.1} parent=11 // pred_check
          %p182 = pneg %p86
        $region18: #{tpu_custom_call.1} parent=11 // pred_check_branch
          %184 = sbr.rel (%p182) target = $region20
        $region19: #{tpu_custom_call.1} parent=11 // pred_region
          _
        $region20: #{tpu_custom_call.1} parent=11 // pred_fallthru
          _
        // Predicated region
        $region21: #{tpu_custom_call.1} parent=11 // pred_check
          %p185 = pneg %p107
        $region22: #{tpu_custom_call.1} parent=11 // pred_check_branch
          %187 = sbr.rel (%p185) target = $region24
        $region23: #{tpu_custom_call.1} parent=11 // pred_region
          %s189 = ssub.s32 6144, 6144
          %190 = vsyncadd [#allocation6], %s189
          %s191 = sshll.u32 [#allocation7], 4
          %s192 = int_to_ptr.vmem [resolvable:$true] %s191
          %197 = dma.hbm_to_vmem [thread:$0]  %s3, 6144, %s192, [#allocation6], 128, 128, 8
        $region24: #{tpu_custom_call.1} parent=11 // pred_fallthru
          _
        // Predicated region
        $region25: #{tpu_custom_call.1} parent=11 // pred_check
          %p198 = pneg %p128
        $region26: #{tpu_custom_call.1} parent=11 // pred_check_branch
          %200 = sbr.rel (%p198) target = $region28
        $region27: #{tpu_custom_call.1} parent=11 // pred_region
          _
        $region28: #{tpu_custom_call.1} parent=11 // pred_fallthru
          _
      $region12: #{tpu_custom_call.1} parent=5 // pred_fallthru
        _
      %p201 = scmp.lt.s32.totalorder %s18, 2
      // Predicated region
      $region29: #{tpu_custom_call.1} parent=5 // pred_check
        %p202 = pneg %p201
      $region30: #{tpu_custom_call.1} parent=5 // pred_check_branch
        %204 = sbr.rel (%p202) target = $region32
      $region31: #{tpu_custom_call.1} parent=5 // pred_region
        // Predicated region
        $region33: #{tpu_custom_call.1} parent=31 // pred_check
          %p205 = pneg %p38
        $region34: #{tpu_custom_call.1} parent=31 // pred_check_branch
          %207 = sbr.rel (%p205) target = $region36
        $region35: #{tpu_custom_call.1} parent=31 // pred_region
          %s208 = sand.u32 %s28, 1
          %s209 = scalar_lea.sflag [#allocation3], %s208
          %s210 = sand.u32 %s28, 1
          %s211 = smul.addr %s210, 16
          %s212 = scalar_lea.vmem [#allocation2], %s211
          %s214 = ssub.s32 256, 256
          %215 = vsyncadd %s209, %s214
          %s216 = smul.addr %s18, 2
          %s217 = smul.addr %s216, 128
          %s218 = scalar_lea.hbm %s0, %s217
          %s219 = sshll.u32 %s212, 4
          %s220 = int_to_ptr.vmem [resolvable:$true] %s219
          %225 = dma.hbm_to_vmem [thread:$0]  %s218, 256, %s220, %s209, 128, 128, 8
        $region36: #{tpu_custom_call.1} parent=31 // pred_fallthru
          _
      $region32: #{tpu_custom_call.1} parent=5 // pred_fallthru
        _
      %p226 = scmp.le.s32.totalorder 1, %s18
      %p227 = scmp.lt.s32.totalorder %s18, 3
      %p228 = pnand %p226, %p227
      %p229 = pneg %p228
      // Predicated region
      $region37: #{tpu_custom_call.1} parent=5 // pred_check
        _
      $region38: #{tpu_custom_call.1} parent=5 // pred_check_branch
        %231 = sbr.rel (%p228) target = $region40
      $region39: #{tpu_custom_call.1} parent=5 // pred_region
        %s232 = ssub.s32 %s18, 1
        %s233 = sand.u32 %s31, 1
        %s234 = scalar_lea.sflag [#allocation3], %s233
        %s235 = sand.u32 %s31, 1
        %s236 = smul.addr %s235, 16
        %s237 = scalar_lea.vmem [#allocation2], %s236
        // Predicated region
        $region41: #{tpu_custom_call.1} parent=39 // pred_check
          %p238 = pneg %p44
        $region42: #{tpu_custom_call.1} parent=39 // pred_check_branch
          %240 = sbr.rel (%p238) target = $region44
        $region43: #{tpu_custom_call.1} parent=39 // pred_region
          %241 = dma.done %s234, 256
        $region44: #{tpu_custom_call.1} parent=39 // pred_fallthru
          _
        // Predicated region
        $region45: #{tpu_custom_call.1} parent=39 // pred_check
          %p242 = pneg %p65
        $region46: #{tpu_custom_call.1} parent=39 // pred_check_branch
          %244 = sbr.rel (%p242) target = $region48
        $region47: #{tpu_custom_call.1} parent=39 // pred_region
          %245 = dma.done [#allocation6], 6144
        $region48: #{tpu_custom_call.1} parent=39 // pred_fallthru
          _
        // Predicated region
        $region49: #{tpu_custom_call.1} parent=39 // pred_check
          %p246 = pneg %p107
        $region50: #{tpu_custom_call.1} parent=39 // pred_check_branch
          %248 = sbr.rel (%p246) target = $region52
        $region51: #{tpu_custom_call.1} parent=39 // pred_region
          %249 = dma.done [#allocation6], 6144
        $region52: #{tpu_custom_call.1} parent=39 // pred_fallthru
          _
        %s250 = sand.u32 %s31, 1
        %s251 = scalar_lea.sflag [#allocation3], %s250
        %s252 = sand.u32 %s31, 1
        %s253 = smul.addr %s252, 16
        %s254 = scalar_lea.vmem [#allocation2], %s253
        %p255 = pneg %p44
        %p256 = pneg %p41
        %p257 = pneg %p65
        %p258 = pneg %p62
        %p259 = pneg %p86
        %p260 = pneg %p83
        %p261 = pneg %p107
        %p262 = pneg %p104
        %p263 = pneg %p128
        %p264 = pneg %p125
        %p265 = pneg %p154
        %p266 = pneg %p151
        %s267 = sand.u32 %s141, 1
        %s268 = scalar_lea.sflag [#allocation4], %s267
        %s269 = sand.u32 %s141, 1
        %s270 = smul.addr %s269, 16
        %s271 = scalar_lea.vmem [#allocation8], %s270
        %v272 = vld [vmem:[%s237] sm:$0xff]
        %v273 = vld [vmem:[%s237 + $0x8] sm:$0xff]
        %vm276 = vcmask 1040384
        %v277 = vrot.slane %v272, 7
        %v278 = vrot.slane %v273, 7
        %v279 = vsel %vm276, %v277, %v278
        %v283 = vsel %vm276, 0.0, %v277
        %v284 = vsel %vm276, %v278, 0.0
        %v285 = vld [vmem:[#allocation5] sm:$0xff]
        %v286 = vld [vmem:[#allocation5 + $0x8] sm:$0xff]
        %v287 = vld [vmem:[#allocation5 + $0x10] sm:$0xff]
        %v288 = vld [vmem:[#allocation5 + $0x18] sm:$0xff]
        %v289 = vld [vmem:[#allocation5 + $0x20] sm:$0xff]
        %v290 = vld [vmem:[#allocation5 + $0x28] sm:$0xff]
        %v291 = vld [vmem:[#allocation5 + $0x30] sm:$0xff]
        %v292 = vld [vmem:[#allocation5 + $0x38] sm:$0xff]
        %v293 = vld [vmem:[#allocation5 + $0x40] sm:$0xff]
        %v294 = vld [vmem:[#allocation5 + $0x48] sm:$0xff]
        %v295 = vld [vmem:[#allocation5 + $0x50] sm:$0xff]
        %v296 = vld [vmem:[#allocation5 + $0x58] sm:$0xff]
        %v297 = vld [vmem:[#allocation5 + $0x60] sm:$0xff]
        %v298 = vld [vmem:[#allocation5 + $0x68] sm:$0xff]
        %v299 = vld [vmem:[#allocation5 + $0x70] sm:$0xff]
        %v300 = vld [vmem:[#allocation5 + $0x78] sm:$0xff]
        %s301 = scalar_lea.vmem [#allocation5], 128
        %v302 = vld [vmem:[%s301] sm:$0xff]
        %v303 = vld [vmem:[%s301 + $0x8] sm:$0xff]
        %v304 = vld [vmem:[%s301 + $0x10] sm:$0xff]
        %v305 = vld [vmem:[%s301 + $0x18] sm:$0xff]
        %v306 = vld [vmem:[%s301 + $0x20] sm:$0xff]
        %v307 = vld [vmem:[%s301 + $0x28] sm:$0xff]
        %v308 = vld [vmem:[%s301 + $0x30] sm:$0xff]
        %v309 = vld [vmem:[%s301 + $0x38] sm:$0xff]
        %v310 = vld [vmem:[%s301 + $0x40] sm:$0xff]
        %v311 = vld [vmem:[%s301 + $0x48] sm:$0xff]
        %v312 = vld [vmem:[%s301 + $0x50] sm:$0xff]
        %v313 = vld [vmem:[%s301 + $0x58] sm:$0xff]
        %v314 = vld [vmem:[%s301 + $0x60] sm:$0xff]
        %v315 = vld [vmem:[%s301 + $0x68] sm:$0xff]
        %v316 = vld [vmem:[%s301 + $0x70] sm:$0xff]
        %v317 = vld [vmem:[%s301 + $0x78] sm:$0xff]
        %vm320 = vcmask 1046528
        %v321 = vrot.slane %v283, 1
        %v322 = vrot.slane %v279, 1
        %v323 = vsel %vm320, %v321, %v322
        %v324 = vrot.slane %v284, 1
        %v325 = vsel %vm320, %v322, %v324
        %328 = vmatprep.subr.mxu0 0.0
        %329 = vmatpush1.msra.mxu0 %v302
        %330 = vmatprep.subr.mxu0 0.0
        %331 = vmatpush1.msra.mxu0 %v303
        %332 = vmatprep.subr.mxu0 0.0
        %333 = vmatpush1.msra.mxu0 %v304
        %334 = vmatprep.subr.mxu0 0.0
        %335 = vmatpush1.msra.mxu0 %v305
        %336 = vmatprep.subr.mxu0 0.0
        %337 = vmatpush1.msra.mxu0 %v306
        %338 = vmatprep.subr.mxu0 0.0
        %339 = vmatpush1.msra.mxu0 %v307
        %340 = vmatprep.subr.mxu0 0.0
        %341 = vmatpush1.msra.mxu0 %v308
        %342 = vmatprep.subr.mxu0 0.0
        %343 = vmatpush1.msra.mxu0 %v309
        %344 = vmatprep.subr.mxu0 0.0
        %345 = vmatpush1.msra.mxu0 %v310
        %346 = vmatprep.subr.mxu0 0.0
        %347 = vmatpush1.msra.mxu0 %v311
        %348 = vmatprep.subr.mxu0 0.0
        %349 = vmatpush1.msra.mxu0 %v312
        %350 = vmatprep.subr.mxu0 0.0
        %351 = vmatpush1.msra.mxu0 %v313
        %352 = vmatprep.subr.mxu0 0.0
        %353 = vmatpush1.msra.mxu0 %v314
        %354 = vmatprep.subr.mxu0 0.0
        %355 = vmatpush1.msra.mxu0 %v315
        %356 = vmatprep.subr.mxu0 0.0
        %357 = vmatpush1.msra.mxu0 %v316
        %358 = vmatprep.subr.mxu0 0.0
        %359 = vmatpush1.msra.mxu0 %v317
        %360 = vmatprep.subr.mxu0 0.0
        %361 = vmatpush1.msra.mxu0 0.0
        %362 = vmatprep.subr.mxu0 0.0
        %363 = vmatpush1.msra.mxu0 0.0
        %364 = vmatprep.subr.mxu0 0.0
        %365 = vmatpush1.msra.mxu0 0.0
        %366 = vmatprep.subr.mxu0 0.0
        %367 = vmatpush1.msra.mxu0 0.0
        %368 = vmatprep.subr.mxu0 0.0
        %369 = vmatpush1.msra.mxu0 0.0
        %370 = vmatprep.subr.mxu0 0.0
        %371 = vmatpush1.msra.mxu0 0.0
        %372 = vmatprep.subr.mxu0 0.0
        %373 = vmatpush1.msra.mxu0 0.0
        %374 = vmatprep.subr.mxu0 0.0
        %375 = vmatpush1.msra.mxu0 0.0
        %376 = vmatprep.subr.mxu0 0.0
        %377 = vmatpush1.msra.mxu0 0.0
        %378 = vmatprep.subr.mxu0 0.0
        %379 = vmatpush1.msra.mxu0 0.0
        %380 = vmatprep.subr.mxu0 0.0
        %381 = vmatpush1.msra.mxu0 0.0
        %382 = vmatprep.subr.mxu0 0.0
        %383 = vmatpush1.msra.mxu0 0.0
        %384 = vmatprep.subr.mxu0 0.0
        %385 = vmatpush1.msra.mxu0 0.0
        %386 = vmatprep.subr.mxu0 0.0
        %387 = vmatpush1.msra.mxu0 0.0
        %388 = vmatprep.subr.mxu0 0.0
        %389 = vmatpush1.msra.mxu0 0.0
        %390 = vmatprep.subr.mxu0 0.0
        %391 = vmatpush1.msra.mxu0 0.0
        %392 = vmatprep.mubr.f32.mxu0 0.0
        %393 = vmatmul.mubr.f32.gmra.mrb[0].mxu0 %v323
        %v394 = vpop.f32.mrb[0].mxu0
        %v395 = vadd.f32 0.0, %v394
        %v396 = vpop.f32.mrb[0].mxu0
        %397 = vmatprep.mubr.f32.mxu0 0.0
        %398 = vmatmul.mubr.f32.gmra.mrb[0].mxu0 %v325
        %v399 = vpop.f32.mrb[0].mxu0
        %v400 = vadd.f32 0.0, %v399
        %v401 = vpop.f32.mrb[0].mxu0
        %402 = vdwg.mxu0
        %403 = vmatprep.subr.mxu0 0.0
        %404 = vmatpush1.msra.mxu0 %v285
        %405 = vmatprep.subr.mxu0 0.0
        %406 = vmatpush1.msra.mxu0 %v286
        %407 = vmatprep.subr.mxu0 0.0
        %408 = vmatpush1.msra.mxu0 %v287
        %409 = vmatprep.subr.mxu0 0.0
        %410 = vmatpush1.msra.mxu0 %v288
        %411 = vmatprep.subr.mxu0 0.0
        %412 = vmatpush1.msra.mxu0 %v289
        %413 = vmatprep.subr.mxu0 0.0
        %414 = vmatpush1.msra.mxu0 %v290
        %415 = vmatprep.subr.mxu0 0.0
        %416 = vmatpush1.msra.mxu0 %v291
        %417 = vmatprep.subr.mxu0 0.0
        %418 = vmatpush1.msra.mxu0 %v292
        %419 = vmatprep.subr.mxu0 0.0
        %420 = vmatpush1.msra.mxu0 %v293
        %421 = vmatprep.subr.mxu0 0.0
        %422 = vmatpush1.msra.mxu0 %v294
        %423 = vmatprep.subr.mxu0 0.0
        %424 = vmatpush1.msra.mxu0 %v295
        %425 = vmatprep.subr.mxu0 0.0
        %426 = vmatpush1.msra.mxu0 %v296
        %427 = vmatprep.subr.mxu0 0.0
        %428 = vmatpush1.msra.mxu0 %v297
        %429 = vmatprep.subr.mxu0 0.0
        %430 = vmatpush1.msra.mxu0 %v298
        %431 = vmatprep.subr.mxu0 0.0
        %432 = vmatpush1.msra.mxu0 %v299
        %433 = vmatprep.subr.mxu0 0.0
        %434 = vmatpush1.msra.mxu0 %v300
        %435 = vmatprep.subr.mxu0 0.0
        %436 = vmatpush1.msra.mxu0 0.0
        %437 = vmatprep.subr.mxu0 0.0
        %438 = vmatpush1.msra.mxu0 0.0
        %439 = vmatprep.subr.mxu0 0.0
        %440 = vmatpush1.msra.mxu0 0.0
        %441 = vmatprep.subr.mxu0 0.0
        %442 = vmatpush1.msra.mxu0 0.0
        %443 = vmatprep.subr.mxu0 0.0
        %444 = vmatpush1.msra.mxu0 0.0
        %445 = vmatprep.subr.mxu0 0.0
        %446 = vmatpush1.msra.mxu0 0.0
        %447 = vmatprep.subr.mxu0 0.0
        %448 = vmatpush1.msra.mxu0 0.0
        %449 = vmatprep.subr.mxu0 0.0
        %450 = vmatpush1.msra.mxu0 0.0
        %451 = vmatprep.subr.mxu0 0.0
        %452 = vmatpush1.msra.mxu0 0.0
        %453 = vmatprep.subr.mxu0 0.0
        %454 = vmatpush1.msra.mxu0 0.0
        %455 = vmatprep.subr.mxu0 0.0
        %456 = vmatpush1.msra.mxu0 0.0
        %457 = vmatprep.subr.mxu0 0.0
        %458 = vmatpush1.msra.mxu0 0.0
        %459 = vmatprep.subr.mxu0 0.0
        %460 = vmatpush1.msra.mxu0 0.0
        %461 = vmatprep.subr.mxu0 0.0
        %462 = vmatpush1.msra.mxu0 0.0
        %463 = vmatprep.subr.mxu0 0.0
        %464 = vmatpush1.msra.mxu0 0.0
        %465 = vmatprep.subr.mxu0 0.0
        %466 = vmatpush1.msra.mxu0 0.0
        %467 = vmatprep.mubr.f32.mxu0 0.0
        %468 = vmatmul.mubr.f32.gmra.mrb[0].mxu0 %v283
        %v469 = vpop.f32.mrb[0].mxu0
        %v470 = vadd.f32 %v395, %v469
        %v471 = vpop.f32.mrb[0].mxu0
        %472 = vmatprep.mubr.f32.mxu0 0.0
        %473 = vmatmul.mubr.f32.gmra.mrb[0].mxu0 %v279
        %v474 = vpop.f32.mrb[0].mxu0
        %v475 = vadd.f32 %v400, %v474
        %v476 = vpop.f32.mrb[0].mxu0
        %477 = vdwg.mxu0
        %s478 = scalar_lea.vmem [#allocation5], 256
        %v479 = vld [vmem:[%s478] sm:$0xff]
        %v480 = vld [vmem:[%s478 + $0x8] sm:$0xff]
        %v481 = vld [vmem:[%s478 + $0x10] sm:$0xff]
        %v482 = vld [vmem:[%s478 + $0x18] sm:$0xff]
        %v483 = vld [vmem:[%s478 + $0x20] sm:$0xff]
        %v484 = vld [vmem:[%s478 + $0x28] sm:$0xff]
        %v485 = vld [vmem:[%s478 + $0x30] sm:$0xff]
        %v486 = vld [vmem:[%s478 + $0x38] sm:$0xff]
        %v487 = vld [vmem:[%s478 + $0x40] sm:$0xff]
        %v488 = vld [vmem:[%s478 + $0x48] sm:$0xff]
        %v489 = vld [vmem:[%s478 + $0x50] sm:$0xff]
        %v490 = vld [vmem:[%s478 + $0x58] sm:$0xff]
        %v491 = vld [vmem:[%s478 + $0x60] sm:$0xff]
        %v492 = vld [vmem:[%s478 + $0x68] sm:$0xff]
        %v493 = vld [vmem:[%s478 + $0x70] sm:$0xff]
        %v494 = vld [vmem:[%s478 + $0x78] sm:$0xff]
        %vm495 = vcmask 1045504
        %v496 = vrot.slane %v283, 2
        %v497 = vrot.slane %v279, 2
        %v498 = vsel %vm495, %v496, %v497
        %v499 = vrot.slane %v284, 2
        %v500 = vsel %vm495, %v497, %v499
        %503 = vmatprep.subr.mxu0 0.0
        %504 = vmatpush1.msra.mxu0 %v479
        %505 = vmatprep.subr.mxu0 0.0
        %506 = vmatpush1.msra.mxu0 %v480
        %507 = vmatprep.subr.mxu0 0.0
        %508 = vmatpush1.msra.mxu0 %v481
        %509 = vmatprep.subr.mxu0 0.0
        %510 = vmatpush1.msra.mxu0 %v482
        %511 = vmatprep.subr.mxu0 0.0
        %512 = vmatpush1.msra.mxu0 %v483
        %513 = vmatprep.subr.mxu0 0.0
        %514 = vmatpush1.msra.mxu0 %v484
        %515 = vmatprep.subr.mxu0 0.0
        %516 = vmatpush1.msra.mxu0 %v485
        %517 = vmatprep.subr.mxu0 0.0
        %518 = vmatpush1.msra.mxu0 %v486
        %519 = vmatprep.subr.mxu0 0.0
        %520 = vmatpush1.msra.mxu0 %v487
        %521 = vmatprep.subr.mxu0 0.0
        %522 = vmatpush1.msra.mxu0 %v488
        %523 = vmatprep.subr.mxu0 0.0
        %524 = vmatpush1.msra.mxu0 %v489
        %525 = vmatprep.subr.mxu0 0.0
        %526 = vmatpush1.msra.mxu0 %v490
        %527 = vmatprep.subr.mxu0 0.0
        %528 = vmatpush1.msra.mxu0 %v491
        %529 = vmatprep.subr.mxu0 0.0
        %530 = vmatpush1.msra.mxu0 %v492
        %531 = vmatprep.subr.mxu0 0.0
        %532 = vmatpush1.msra.mxu0 %v493
        %533 = vmatprep.subr.mxu0 0.0
        %534 = vmatpush1.msra.mxu0 %v494
        %535 = vmatprep.subr.mxu0 0.0
        %536 = vmatpush1.msra.mxu0 0.0
        %537 = vmatprep.subr.mxu0 0.0
        %538 = vmatpush1.msra.mxu0 0.0
        %539 = vmatprep.subr.mxu0 0.0
        %540 = vmatpush1.msra.mxu0 0.0
        %541 = vmatprep.subr.mxu0 0.0
        %542 = vmatpush1.msra.mxu0 0.0
        %543 = vmatprep.subr.mxu0 0.0
        %544 = vmatpush1.msra.mxu0 0.0
        %545 = vmatprep.subr.mxu0 0.0
        %546 = vmatpush1.msra.mxu0 0.0
        %547 = vmatprep.subr.mxu0 0.0
        %548 = vmatpush1.msra.mxu0 0.0
        %549 = vmatprep.subr.mxu0 0.0
        %550 = vmatpush1.msra.mxu0 0.0
        %551 = vmatprep.subr.mxu0 0.0
        %552 = vmatpush1.msra.mxu0 0.0
        %553 = vmatprep.subr.mxu0 0.0
        %554 = vmatpush1.msra.mxu0 0.0
        %555 = vmatprep.subr.mxu0 0.0
        %556 = vmatpush1.msra.mxu0 0.0
        %557 = vmatprep.subr.mxu0 0.0
        %558 = vmatpush1.msra.mxu0 0.0
        %559 = vmatprep.subr.mxu0 0.0
        %560 = vmatpush1.msra.mxu0 0.0
        %561 = vmatprep.subr.mxu0 0.0
        %562 = vmatpush1.msra.mxu0 0.0
        %563 = vmatprep.subr.mxu0 0.0
        %564 = vmatpush1.msra.mxu0 0.0
        %565 = vmatprep.subr.mxu0 0.0
        %566 = vmatpush1.msra.mxu0 0.0
        %567 = vmatprep.mubr.f32.mxu0 0.0
        %568 = vmatmul.mubr.f32.gmra.mrb[0].mxu0 %v498
        %v569 = vpop.f32.mrb[0].mxu0
        %v570 = vadd.f32 0.0, %v569
        %v571 = vpop.f32.mrb[0].mxu0
        %572 = vmatprep.mubr.f32.mxu0 0.0
        %573 = vmatmul.mubr.f32.gmra.mrb[0].mxu0 %v500
        %v574 = vpop.f32.mrb[0].mxu0
        %v575 = vadd.f32 0.0, %v574
        %v576 = vpop.f32.mrb[0].mxu0
        %577 = vdwg.mxu0
        %v578 = vadd.f32 %v470, %v570
        %v579 = vadd.f32 %v475, %v575
        %v580 = vld [vmem:[%s2] sm:$0x1]
        %v582 = vlaneseq
        %v583 = vshrl.u32 %v582, 7
        %v584 = vsub.s32 0, %v583
        %v585 = vrot.slane %v580, %v584
        %v587 = vadd.f32 %v578, %v585
        %v588 = vadd.f32 %v579, %v585
        %v589 = vmax.f32 %v587, 0.0
        %v590 = vmax.f32 %v588, 0.0
        %v593 = vrot.slane %v589, 7
        %v594 = vrot.slane %v590, 7
        %v595 = vsel %vm276, %v593, %v594
        %v599 = vsel %vm276, 0.0, %v593
        %v600 = vsel %vm276, %v594, 0.0
        %v601 = vld [vmem:[#allocation7] sm:$0xff]
        %v602 = vld [vmem:[#allocation7 + $0x8] sm:$0xff]
        %v603 = vld [vmem:[#allocation7 + $0x10] sm:$0xff]
        %v604 = vld [vmem:[#allocation7 + $0x18] sm:$0xff]
        %v605 = vld [vmem:[#allocation7 + $0x20] sm:$0xff]
        %v606 = vld [vmem:[#allocation7 + $0x28] sm:$0xff]
        %v607 = vld [vmem:[#allocation7 + $0x30] sm:$0xff]
        %v608 = vld [vmem:[#allocation7 + $0x38] sm:$0xff]
        %v609 = vld [vmem:[#allocation7 + $0x40] sm:$0xff]
        %v610 = vld [vmem:[#allocation7 + $0x48] sm:$0xff]
        %v611 = vld [vmem:[#allocation7 + $0x50] sm:$0xff]
        %v612 = vld [vmem:[#allocation7 + $0x58] sm:$0xff]
        %v613 = vld [vmem:[#allocation7 + $0x60] sm:$0xff]
        %v614 = vld [vmem:[#allocation7 + $0x68] sm:$0xff]
        %v615 = vld [vmem:[#allocation7 + $0x70] sm:$0xff]
        %v616 = vld [vmem:[#allocation7 + $0x78] sm:$0xff]
        %s617 = scalar_lea.vmem [#allocation7], 128
        %v618 = vld [vmem:[%s617] sm:$0xff]
        %v619 = vld [vmem:[%s617 + $0x8] sm:$0xff]
        %v620 = vld [vmem:[%s617 + $0x10] sm:$0xff]
        %v621 = vld [vmem:[%s617 + $0x18] sm:$0xff]
        %v622 = vld [vmem:[%s617 + $0x20] sm:$0xff]
        %v623 = vld [vmem:[%s617 + $0x28] sm:$0xff]
        %v624 = vld [vmem:[%s617 + $0x30] sm:$0xff]
        %v625 = vld [vmem:[%s617 + $0x38] sm:$0xff]
        %v626 = vld [vmem:[%s617 + $0x40] sm:$0xff]
        %v627 = vld [vmem:[%s617 + $0x48] sm:$0xff]
        %v628 = vld [vmem:[%s617 + $0x50] sm:$0xff]
        %v629 = vld [vmem:[%s617 + $0x58] sm:$0xff]
        %v630 = vld [vmem:[%s617 + $0x60] sm:$0xff]
        %v631 = vld [vmem:[%s617 + $0x68] sm:$0xff]
        %v632 = vld [vmem:[%s617 + $0x70] sm:$0xff]
        %v633 = vld [vmem:[%s617 + $0x78] sm:$0xff]
        %v636 = vrot.slane %v599, 1
        %v637 = vrot.slane %v595, 1
        %v638 = vsel %vm320, %v636, %v637
        %v639 = vrot.slane %v600, 1
        %v640 = vsel %vm320, %v637, %v639
        %643 = vmatprep.subr.mxu0 0.0
        %644 = vmatpush1.msra.mxu0 %v618
        %645 = vmatprep.subr.mxu0 0.0
        %646 = vmatpush1.msra.mxu0 %v619
        %647 = vmatprep.subr.mxu0 0.0
        %648 = vmatpush1.msra.mxu0 %v620
        %649 = vmatprep.subr.mxu0 0.0
        %650 = vmatpush1.msra.mxu0 %v621
        %651 = vmatprep.subr.mxu0 0.0
        %652 = vmatpush1.msra.mxu0 %v622
        %653 = vmatprep.subr.mxu0 0.0
        %654 = vmatpush1.msra.mxu0 %v623
        %655 = vmatprep.subr.mxu0 0.0
        %656 = vmatpush1.msra.mxu0 %v624
        %657 = vmatprep.subr.mxu0 0.0
        %658 = vmatpush1.msra.mxu0 %v625
        %659 = vmatprep.subr.mxu0 0.0
        %660 = vmatpush1.msra.mxu0 %v626
        %661 = vmatprep.subr.mxu0 0.0
        %662 = vmatpush1.msra.mxu0 %v627
        %663 = vmatprep.subr.mxu0 0.0
        %664 = vmatpush1.msra.mxu0 %v628
        %665 = vmatprep.subr.mxu0 0.0
        %666 = vmatpush1.msra.mxu0 %v629
        %667 = vmatprep.subr.mxu0 0.0
        %668 = vmatpush1.msra.mxu0 %v630
        %669 = vmatprep.subr.mxu0 0.0
        %670 = vmatpush1.msra.mxu0 %v631
        %671 = vmatprep.subr.mxu0 0.0
        %672 = vmatpush1.msra.mxu0 %v632
        %673 = vmatprep.subr.mxu0 0.0
        %674 = vmatpush1.msra.mxu0 %v633
        %675 = vmatprep.subr.mxu0 0.0
        %676 = vmatpush1.msra.mxu0 0.0
        %677 = vmatprep.subr.mxu0 0.0
        %678 = vmatpush1.msra.mxu0 0.0
        %679 = vmatprep.subr.mxu0 0.0
        %680 = vmatpush1.msra.mxu0 0.0
        %681 = vmatprep.subr.mxu0 0.0
        %682 = vmatpush1.msra.mxu0 0.0
        %683 = vmatprep.subr.mxu0 0.0
        %684 = vmatpush1.msra.mxu0 0.0
        %685 = vmatprep.subr.mxu0 0.0
        %686 = vmatpush1.msra.mxu0 0.0
        %687 = vmatprep.subr.mxu0 0.0
        %688 = vmatpush1.msra.mxu0 0.0
        %689 = vmatprep.subr.mxu0 0.0
        %690 = vmatpush1.msra.mxu0 0.0
        %691 = vmatprep.subr.mxu0 0.0
        %692 = vmatpush1.msra.mxu0 0.0
        %693 = vmatprep.subr.mxu0 0.0
        %694 = vmatpush1.msra.mxu0 0.0
        %695 = vmatprep.subr.mxu0 0.0
        %696 = vmatpush1.msra.mxu0 0.0
        %697 = vmatprep.subr.mxu0 0.0
        %698 = vmatpush1.msra.mxu0 0.0
        %699 = vmatprep.subr.mxu0 0.0
        %700 = vmatpush1.msra.mxu0 0.0
        %701 = vmatprep.subr.mxu0 0.0
        %702 = vmatpush1.msra.mxu0 0.0
        %703 = vmatprep.subr.mxu0 0.0
        %704 = vmatpush1.msra.mxu0 0.0
        %705 = vmatprep.subr.mxu0 0.0
        %706 = vmatpush1.msra.mxu0 0.0
        %707 = vmatprep.mubr.f32.mxu0 0.0
        %708 = vmatmul.mubr.f32.gmra.mrb[0].mxu0 %v638
        %v709 = vpop.f32.mrb[0].mxu0
        %v710 = vadd.f32 0.0, %v709
        %v711 = vpop.f32.mrb[0].mxu0
        %712 = vmatprep.mubr.f32.mxu0 0.0
        %713 = vmatmul.mubr.f32.gmra.mrb[0].mxu0 %v640
        %v714 = vpop.f32.mrb[0].mxu0
        %v715 = vadd.f32 0.0, %v714
        %v716 = vpop.f32.mrb[0].mxu0
        %717 = vdwg.mxu0
        %718 = vmatprep.subr.mxu0 0.0
        %719 = vmatpush1.msra.mxu0 %v601
        %720 = vmatprep.subr.mxu0 0.0
        %721 = vmatpush1.msra.mxu0 %v602
        %722 = vmatprep.subr.mxu0 0.0
        %723 = vmatpush1.msra.mxu0 %v603
        %724 = vmatprep.subr.mxu0 0.0
        %725 = vmatpush1.msra.mxu0 %v604
        %726 = vmatprep.subr.mxu0 0.0
        %727 = vmatpush1.msra.mxu0 %v605
        %728 = vmatprep.subr.mxu0 0.0
        %729 = vmatpush1.msra.mxu0 %v606
        %730 = vmatprep.subr.mxu0 0.0
        %731 = vmatpush1.msra.mxu0 %v607
        %732 = vmatprep.subr.mxu0 0.0
        %733 = vmatpush1.msra.mxu0 %v608
        %734 = vmatprep.subr.mxu0 0.0
        %735 = vmatpush1.msra.mxu0 %v609
        %736 = vmatprep.subr.mxu0 0.0
        %737 = vmatpush1.msra.mxu0 %v610
        %738 = vmatprep.subr.mxu0 0.0
        %739 = vmatpush1.msra.mxu0 %v611
        %740 = vmatprep.subr.mxu0 0.0
        %741 = vmatpush1.msra.mxu0 %v612
        %742 = vmatprep.subr.mxu0 0.0
        %743 = vmatpush1.msra.mxu0 %v613
        %744 = vmatprep.subr.mxu0 0.0
        %745 = vmatpush1.msra.mxu0 %v614
        %746 = vmatprep.subr.mxu0 0.0
        %747 = vmatpush1.msra.mxu0 %v615
        %748 = vmatprep.subr.mxu0 0.0
        %749 = vmatpush1.msra.mxu0 %v616
        %750 = vmatprep.subr.mxu0 0.0
        %751 = vmatpush1.msra.mxu0 0.0
        %752 = vmatprep.subr.mxu0 0.0
        %753 = vmatpush1.msra.mxu0 0.0
        %754 = vmatprep.subr.mxu0 0.0
        %755 = vmatpush1.msra.mxu0 0.0
        %756 = vmatprep.subr.mxu0 0.0
        %757 = vmatpush1.msra.mxu0 0.0
        %758 = vmatprep.subr.mxu0 0.0
        %759 = vmatpush1.msra.mxu0 0.0
        %760 = vmatprep.subr.mxu0 0.0
        %761 = vmatpush1.msra.mxu0 0.0
        %762 = vmatprep.subr.mxu0 0.0
        %763 = vmatpush1.msra.mxu0 0.0
        %764 = vmatprep.subr.mxu0 0.0
        %765 = vmatpush1.msra.mxu0 0.0
        %766 = vmatprep.subr.mxu0 0.0
        %767 = vmatpush1.msra.mxu0 0.0
        %768 = vmatprep.subr.mxu0 0.0
        %769 = vmatpush1.msra.mxu0 0.0
        %770 = vmatprep.subr.mxu0 0.0
        %771 = vmatpush1.msra.mxu0 0.0
        %772 = vmatprep.subr.mxu0 0.0
        %773 = vmatpush1.msra.mxu0 0.0
        %774 = vmatprep.subr.mxu0 0.0
        %775 = vmatpush1.msra.mxu0 0.0
        %776 = vmatprep.subr.mxu0 0.0
        %777 = vmatpush1.msra.mxu0 0.0
        %778 = vmatprep.subr.mxu0 0.0
        %779 = vmatpush1.msra.mxu0 0.0
        %780 = vmatprep.subr.mxu0 0.0
        %781 = vmatpush1.msra.mxu0 0.0
        %782 = vmatprep.mubr.f32.mxu0 0.0
        %783 = vmatmul.mubr.f32.gmra.mrb[0].mxu0 %v599
        %v784 = vpop.f32.mrb[0].mxu0
        %v785 = vadd.f32 %v710, %v784
        %v786 = vpop.f32.mrb[0].mxu0
        %787 = vmatprep.mubr.f32.mxu0 0.0
        %788 = vmatmul.mubr.f32.gmra.mrb[0].mxu0 %v595
        %v789 = vpop.f32.mrb[0].mxu0
        %v790 = vadd.f32 %v715, %v789
        %v791 = vpop.f32.mrb[0].mxu0
        %792 = vdwg.mxu0
        %s793 = scalar_lea.vmem [#allocation7], 256
        %v794 = vld [vmem:[%s793] sm:$0xff]
        %v795 = vld [vmem:[%s793 + $0x8] sm:$0xff]
        %v796 = vld [vmem:[%s793 + $0x10] sm:$0xff]
        %v797 = vld [vmem:[%s793 + $0x18] sm:$0xff]
        %v798 = vld [vmem:[%s793 + $0x20] sm:$0xff]
        %v799 = vld [vmem:[%s793 + $0x28] sm:$0xff]
        %v800 = vld [vmem:[%s793 + $0x30] sm:$0xff]
        %v801 = vld [vmem:[%s793 + $0x38] sm:$0xff]
        %v802 = vld [vmem:[%s793 + $0x40] sm:$0xff]
        %v803 = vld [vmem:[%s793 + $0x48] sm:$0xff]
        %v804 = vld [vmem:[%s793 + $0x50] sm:$0xff]
        %v805 = vld [vmem:[%s793 + $0x58] sm:$0xff]
        %v806 = vld [vmem:[%s793 + $0x60] sm:$0xff]
        %v807 = vld [vmem:[%s793 + $0x68] sm:$0xff]
        %v808 = vld [vmem:[%s793 + $0x70] sm:$0xff]
        %v809 = vld [vmem:[%s793 + $0x78] sm:$0xff]
        %v810 = vrot.slane %v599, 2
        %v811 = vrot.slane %v595, 2
        %v812 = vsel %vm495, %v810, %v811
        %v813 = vrot.slane %v600, 2
        %v814 = vsel %vm495, %v811, %v813
        %817 = vmatprep.subr.mxu0 0.0
        %818 = vmatpush1.msra.mxu0 %v794
        %819 = vmatprep.subr.mxu0 0.0
        %820 = vmatpush1.msra.mxu0 %v795
        %821 = vmatprep.subr.mxu0 0.0
        %822 = vmatpush1.msra.mxu0 %v796
        %823 = vmatprep.subr.mxu0 0.0
        %824 = vmatpush1.msra.mxu0 %v797
        %825 = vmatprep.subr.mxu0 0.0
        %826 = vmatpush1.msra.mxu0 %v798
        %827 = vmatprep.subr.mxu0 0.0
        %828 = vmatpush1.msra.mxu0 %v799
        %829 = vmatprep.subr.mxu0 0.0
        %830 = vmatpush1.msra.mxu0 %v800
        %831 = vmatprep.subr.mxu0 0.0
        %832 = vmatpush1.msra.mxu0 %v801
        %833 = vmatprep.subr.mxu0 0.0
        %834 = vmatpush1.msra.mxu0 %v802
        %835 = vmatprep.subr.mxu0 0.0
        %836 = vmatpush1.msra.mxu0 %v803
        %837 = vmatprep.subr.mxu0 0.0
        %838 = vmatpush1.msra.mxu0 %v804
        %839 = vmatprep.subr.mxu0 0.0
        %840 = vmatpush1.msra.mxu0 %v805
        %841 = vmatprep.subr.mxu0 0.0
        %842 = vmatpush1.msra.mxu0 %v806
        %843 = vmatprep.subr.mxu0 0.0
        %844 = vmatpush1.msra.mxu0 %v807
        %845 = vmatprep.subr.mxu0 0.0
        %846 = vmatpush1.msra.mxu0 %v808
        %847 = vmatprep.subr.mxu0 0.0
        %848 = vmatpush1.msra.mxu0 %v809
        %849 = vmatprep.subr.mxu0 0.0
        %850 = vmatpush1.msra.mxu0 0.0
        %851 = vmatprep.subr.mxu0 0.0
        %852 = vmatpush1.msra.mxu0 0.0
        %853 = vmatprep.subr.mxu0 0.0
        %854 = vmatpush1.msra.mxu0 0.0
        %855 = vmatprep.subr.mxu0 0.0
        %856 = vmatpush1.msra.mxu0 0.0
        %857 = vmatprep.subr.mxu0 0.0
        %858 = vmatpush1.msra.mxu0 0.0
        %859 = vmatprep.subr.mxu0 0.0
        %860 = vmatpush1.msra.mxu0 0.0
        %861 = vmatprep.subr.mxu0 0.0
        %862 = vmatpush1.msra.mxu0 0.0
        %863 = vmatprep.subr.mxu0 0.0
        %864 = vmatpush1.msra.mxu0 0.0
        %865 = vmatprep.subr.mxu0 0.0
        %866 = vmatpush1.msra.mxu0 0.0
        %867 = vmatprep.subr.mxu0 0.0
        %868 = vmatpush1.msra.mxu0 0.0
        %869 = vmatprep.subr.mxu0 0.0
        %870 = vmatpush1.msra.mxu0 0.0
        %871 = vmatprep.subr.mxu0 0.0
        %872 = vmatpush1.msra.mxu0 0.0
        %873 = vmatprep.subr.mxu0 0.0
        %874 = vmatpush1.msra.mxu0 0.0
        %875 = vmatprep.subr.mxu0 0.0
        %876 = vmatpush1.msra.mxu0 0.0
        %877 = vmatprep.subr.mxu0 0.0
        %878 = vmatpush1.msra.mxu0 0.0
        %879 = vmatprep.subr.mxu0 0.0
        %880 = vmatpush1.msra.mxu0 0.0
        %881 = vmatprep.mubr.f32.mxu0 0.0
        %882 = vmatmul.mubr.f32.gmra.mrb[0].mxu0 %v812
        %v883 = vpop.f32.mrb[0].mxu0
        %v884 = vadd.f32 0.0, %v883
        %v885 = vpop.f32.mrb[0].mxu0
        %886 = vmatprep.mubr.f32.mxu0 0.0
        %887 = vmatmul.mubr.f32.gmra.mrb[0].mxu0 %v814
        %v888 = vpop.f32.mrb[0].mxu0
        %v889 = vadd.f32 0.0, %v888
        %v890 = vpop.f32.mrb[0].mxu0
        %891 = vdwg.mxu0
        %v892 = vadd.f32 %v785, %v884
        %v893 = vadd.f32 %v790, %v889
        %v894 = vld [vmem:[%s4] sm:$0x1]
        %v896 = vlaneseq
        %v897 = vshrl.u32 %v896, 7
        %v898 = vsub.s32 0, %v897
        %v899 = vrot.slane %v894, %v898
        %v901 = vadd.f32 %v892, %v899
        %v902 = vadd.f32 %v893, %v899
        %v903 = vadd.f32 %v901, %v272
        %v904 = vadd.f32 %v902, %v273
        %905 = vst [vmem:[%s271] sm:$0xff] %v903
        %906 = vst [vmem:[%s271 + $0x8] sm:$0xff] %v904
        %s907 = sand.u32 %s141, 1
        %s908 = scalar_lea.sflag [#allocation4], %s907
        %s909 = sand.u32 %s141, 1
        %s910 = smul.addr %s909, 16
        %s911 = scalar_lea.vmem [#allocation8], %s910
        // Predicated region
        $region53: #{tpu_custom_call.1} parent=39 // pred_check
          %p912 = pneg %p151
        $region54: #{tpu_custom_call.1} parent=39 // pred_check_branch
          %914 = sbr.rel (%p912) target = $region56
        $region55: #{tpu_custom_call.1} parent=39 // pred_region
          %s916 = ssub.s32 256, 256
          %917 = vsyncadd %s908, %s916
          %s918 = smul.addr %s23, 2
          %s919 = smul.addr %s918, 128
          %s920 = scalar_lea.hbm %s5, %s919
          %s921 = sshll.u32 %s911, 4
          %s922 = int_to_ptr.vmem [resolvable:$true] %s921
          %927 = dma.vmem_to_hbm [thread:$0]  %s922, 256, %s920, %s908, 128, 128, 8
        $region56: #{tpu_custom_call.1} parent=39 // pred_fallthru
          _
      $region40: #{tpu_custom_call.1} parent=5 // pred_fallthru
        _
      %p928 = scmp.le.s32.totalorder 2, %s18
      // Predicated region
      $region57: #{tpu_custom_call.1} parent=5 // pred_check
        %p929 = pneg %p928
      $region58: #{tpu_custom_call.1} parent=5 // pred_check_branch
        %931 = sbr.rel (%p929) target = $region60
      $region59: #{tpu_custom_call.1} parent=5 // pred_region
        %s932 = ssub.s32 %s18, 2
        // Predicated region
        $region61: #{tpu_custom_call.1} parent=59 // pred_check
          %p933 = pneg %p157
        $region62: #{tpu_custom_call.1} parent=59 // pred_check_branch
          %935 = sbr.rel (%p933) target = $region64
        $region63: #{tpu_custom_call.1} parent=59 // pred_region
          %s936 = sand.u32 %s142, 1
          %s937 = scalar_lea.sflag [#allocation4], %s936
          %s938 = sand.u32 %s142, 1
          %s939 = smul.addr %s938, 16
          %s940 = scalar_lea.vmem [#allocation8], %s939
          %941 = dma.done %s937, 256
        $region64: #{tpu_custom_call.1} parent=59 // pred_fallthru
          _
      $region60: #{tpu_custom_call.1} parent=5 // pred_fallthru
        _
    $region6: #{tpu_custom_call.1} parent=1 // loop_footer
      %s22 = sadd.s32 1, %s18
    $region7: #{tpu_custom_call.1} parent=1 // loop_footer_branch
      %17 = sbr.rel target = $region3
    $region8: #{tpu_custom_call.1} parent=1 // loop_exit
      _
    %942 = vsyncpa [#allocation3], 1
    %s943 = scalar_lea.sflag [#allocation3], 1
    %944 = vsyncpa %s943, 1
    %945 = vsyncpa [#allocation6], 1
    %946 = vsyncpa [#allocation4], 1
    %s947 = scalar_lea.sflag [#allocation4], 1
    %948 = vsyncpa %s947, 1

</llo_original>
